<compile_context>
chip_gen: v5e
topology: v5e:2x2
jax: 0.10.0
libtpu: 0.0.40
codegen_flags: <defaults>
</compile_context>

<pallas_src>
import functools

import jax
import jax.numpy as jnp
from jax.experimental import pallas as pl
from jax.experimental.pallas import tpu as pltpu


def _gather_chunk(idx_ref, table_ref, logits_ref):
    """Copy table rows idx[base + r] (r = 0..R-1) into the (R, V) logits block."""
    i = pl.program_id(0)
    R = logits_ref.shape[0]
    base = i * R

    @pl.loop(0, R)
    def _(r):
        t = idx_ref[base + r]                       # scalar int32 read from SMEM
        logits_ref[pl.ds(r, 1), :] = table_ref[pl.ds(t, 1), :]


def _bigram_logits_kernel(idx_ref, table_ref, logits_ref):
    """Inference path: batched in-VMEM embedding gather, no loss."""
    _gather_chunk(idx_ref, table_ref, logits_ref)


def _bigram_loss_kernel(idx_ref, table_ref, tgt_ref, logits_ref, rowloss_ref, *, bt):
    """Training path: batched gather + per-row cross-entropy over an (R, V) slab."""
    i = pl.program_id(0)
    R, V = logits_ref.shape
    base = i * R

    _gather_chunk(idx_ref, table_ref, logits_ref)

    rows = logits_ref[...].astype(jnp.float32)                        # (R, V)

    # Row-wise logsumexp: one max, one exp+sum (EUP/XLU), one log.
    m = jnp.max(rows, axis=-1, keepdims=True)                         # (R, 1)
    s = jnp.sum(jnp.exp(rows - m), axis=-1, keepdims=True)            # (R, 1)
    lse = jnp.log(s) + m                                              # (R, 1)

    # Target logit: single iota-compare masked-sum over the slab.
    tgt = tgt_ref[...]                                                # (R, 1) int32
    col = jax.lax.broadcasted_iota(jnp.int32, (R, V), 1)
    tgt_logit = jnp.sum(jnp.where(col == tgt, rows, 0.0),
                        axis=-1, keepdims=True)                       # (R, 1)

    # Mask padded rows (global row id >= BT) out of the loss.
    row_ids = base + jax.lax.broadcasted_iota(jnp.int32, (R, 1), 0)
    valid = (row_ids < bt).astype(jnp.float32)
    rowloss_ref[...] = ((lse - tgt_logit) * valid).astype(rowloss_ref.dtype)


def _chunking(BT):
    """Pick rows-per-grid-step R (multiple of 8) and padded row count."""
    R = 128 if BT >= 128 else ((BT + 7) // 8) * 8
    BT_pad = ((BT + R - 1) // R) * R
    return R, BT_pad


def _vmem_limit_bytes(V, R, itemsize):
    table_b = V * V * itemsize
    # double-buffered (R, V) logits blocks + small int32/f32 (R, 1) blocks + headroom
    blocks_b = 4 * R * V * max(itemsize, 4) + 8 * R * 4
    est = table_b + blocks_b + (8 << 20)
    return int(min(max(est, 32 << 20), 64 << 20))


def bigram_lm_forward(idx, targets, table):
    """Pallas implementation of BigramLM.forward.

    idx, targets: (B, T) int; table: (V, V) float.
    Returns (logits, loss): logits is (B*T, V) when targets is given (matching
    the PyTorch .view), else (B, T, V) with loss None.
    """
    B, T = idx.shape
    V = table.shape[0]
    BT = B * T
    R, BT_pad = _chunking(BT)
    num_chunks = BT_pad // R

    idx_flat = idx.reshape(BT).astype(jnp.int32)
    idx_pad = jnp.pad(idx_flat, (0, BT_pad - BT))           # pad rows gather table row 0

    vmem_limit = _vmem_limit_bytes(V, R, jnp.dtype(table.dtype).itemsize)
    compiler_params = pltpu.CompilerParams(
        dimension_semantics=("parallel",),
        vmem_limit_bytes=vmem_limit,
    )

    if targets is None:
        logits = pl.pallas_call(
            _bigram_logits_kernel,
            out_shape=jax.ShapeDtypeStruct((BT_pad, V), table.dtype),
            grid_spec=pltpu.PrefetchScalarGridSpec(
                num_scalar_prefetch=1,
                grid=(num_chunks,),
                in_specs=[
                    # Whole table resident in VMEM (constant block index => one DMA).
                    pl.BlockSpec((V, V), lambda i, idx_ref: (0, 0)),
                ],
                out_specs=pl.BlockSpec((R, V), lambda i, idx_ref: (i, 0)),
            ),
            compiler_params=compiler_params,
        )(idx_pad, table)
        return logits[:BT].reshape(B, T, V), None

    tgt_flat = targets.reshape(BT).astype(jnp.int32)
    tgt_pad = jnp.pad(tgt_flat, (0, BT_pad - BT)).reshape(BT_pad, 1)

    kernel = functools.partial(_bigram_loss_kernel, bt=BT)

    logits, rowloss = pl.pallas_call(
        kernel,
        out_shape=(
            jax.ShapeDtypeStruct((BT_pad, V), table.dtype),
            jax.ShapeDtypeStruct((BT_pad, 1), jnp.float32),
        ),
        grid_spec=pltpu.PrefetchScalarGridSpec(
            num_scalar_prefetch=1,
            grid=(num_chunks,),
            in_specs=[
                pl.BlockSpec((V, V), lambda i, idx_ref: (0, 0)),   # resident table
                pl.BlockSpec((R, 1), lambda i, idx_ref: (i, 0)),   # targets chunk
            ],
            out_specs=(
                pl.BlockSpec((R, V), lambda i, idx_ref: (i, 0)),   # logits chunk
                pl.BlockSpec((R, 1), lambda i, idx_ref: (i, 0)),   # per-row loss chunk
            ),
        ),
        compiler_params=compiler_params,
    )(idx_pad, table, tgt_pad)

    # Padded rows contribute exactly 0, so a plain sum / BT is the mean CE.
    loss = jnp.sum(rowloss) / BT
    return logits[:BT].reshape(BT, V), loss


def _reference(idx, targets, table):
    ref_logits = table[idx.reshape(-1)]                              # (BT, V)
    ref_lse = jax.nn.logsumexp(ref_logits.astype(jnp.float32), axis=-1)
    ref_tgt = jnp.take_along_axis(ref_logits.astype(jnp.float32),
                                  targets.reshape(-1, 1), axis=-1)[:, 0]
    ref_loss = jnp.mean(ref_lse - ref_tgt)
    return ref_logits, ref_loss


if __name__ == "__main__":
    key = jax.random.PRNGKey(0)
    k_idx, k_tgt, k_tab, k_idx2, k_tgt2 = jax.random.split(key, 5)

    V = 128        # vocab_size (lane-aligned)
    B, T = 2, 8    # small batch / sequence
    # nn.Embedding default init is N(0, 1).
    table = jax.random.normal(k_tab, (V, V), dtype=jnp.float32)

    idx = jax.random.randint(k_idx, (B, T), 0, V, dtype=jnp.int32)
    targets = jax.random.randint(k_tgt, (B, T), 0, V, dtype=jnp.int32)

    # Training path (targets given): logits (B*T, V) and mean CE loss.
    logits, loss = bigram_lm_forward(idx, targets, table)
    jax.block_until_ready((logits, loss))

    # Inference path (targets=None): logits (B, T, V), loss None.
    logits_inf, loss_inf = bigram_lm_forward(idx, None, table)
    jax.block_until_ready(logits_inf)

    ref_logits, ref_loss = _reference(idx, targets, table)
    assert logits.shape == (B * T, V)
    assert jnp.allclose(logits, ref_logits, atol=1e-5, rtol=1e-5)
    assert jnp.allclose(loss, ref_loss, atol=1e-5, rtol=1e-5)
    assert loss_inf is None
    assert logits_inf.shape == (B, T, V)
    assert jnp.allclose(logits_inf, ref_logits.reshape(B, T, V), atol=1e-5, rtol=1e-5)

    # Second config exercising multi-chunk grid + row padding (BT=148 -> 2 chunks of 128).
    B2, T2 = 4, 37
    idx2 = jax.random.randint(k_idx2, (B2, T2), 0, V, dtype=jnp.int32)
    targets2 = jax.random.randint(k_tgt2, (B2, T2), 0, V, dtype=jnp.int32)
    logits2, loss2 = bigram_lm_forward(idx2, targets2, table)
    jax.block_until_ready((logits2, loss2))
    ref_logits2, ref_loss2 = _reference(idx2, targets2, table)
    assert logits2.shape == (B2 * T2, V)
    assert jnp.allclose(logits2, ref_logits2, atol=1e-5, rtol=1e-5)
    assert jnp.allclose(loss2, ref_loss2, atol=1e-5, rtol=1e-5)

    print("KERNEL_OK")
</pallas_src>

<mosaic_0001>
module attributes {stable_mosaic.version = 11 : i64} {
  func.func @_bigram_loss_kernel(%arg0: i32, %arg1: memref<16xi32, #tpu.memory_space<smem>>, %arg2: memref<128x128xf32, #tpu.memory_space<vmem>>, %arg3: memref<16x1xi32, #tpu.memory_space<vmem>>, %arg4: memref<16x128xf32, #tpu.memory_space<vmem>>, %arg5: memref<16x1xf32, #tpu.memory_space<vmem>>) attributes {dimension_semantics = [#tpu.dimension_semantics<parallel>], iteration_bounds = array<i64: 1>, scalar_prefetch = 1 : i64, scratch_operands = 0 : i64, tpu.core_type = #tpu.core_type<tc>, window_params = [{pipeline_mode = #tpu.pipeline_mode<synchronous>, transform_indices = @transform_0, window_bounds = array<i64: 128, 128>}, {transform_indices = @transform_1, window_bounds = array<i64: 16, 1>}, {transform_indices = @transform_2, window_bounds = array<i64: 16, 128>}, {transform_indices = @transform_3, window_bounds = array<i64: 16, 1>}]} {
    %c16_i32 = arith.constant 16 : i32
    %0 = arith.muli %arg0, %c16_i32 : i32
    %c16_i32_0 = arith.constant 16 : i32
    %1 = arith.muli %arg0, %c16_i32_0 : i32
    %c0_i32 = arith.constant 0 : i32
    %c16_i32_1 = arith.constant 16 : i32
    %2 = arith.addi %c0_i32, %c16_i32_1 : i32
    %c1_i32 = arith.constant 1 : i32
    scf.for %arg6 = %c0_i32 to %2 step %c1_i32  : i32 {
      %c1_i32_12 = arith.constant 1 : i32
      %31 = arith.muli %arg6, %c1_i32_12 : i32
      %c0_i32_13 = arith.constant 0 : i32
      %32 = arith.addi %c0_i32_13, %31 : i32
      %33 = arith.addi %1, %32 : i32
      %34 = arith.index_cast %33 : i32 to index
      %35 = memref.load %arg1[%34] : memref<16xi32, #tpu.memory_space<smem>>
      %36 = arith.index_cast %35 : i32 to index
      %c0_14 = arith.constant 0 : index
      %37 = vector.load %arg2[%36, %c0_14] : memref<128x128xf32, #tpu.memory_space<vmem>>, vector<1x128xf32>
      %38 = arith.index_cast %32 : i32 to index
      %c0_15 = arith.constant 0 : index
      %39 = vector.load %arg4[%38, %c0_15] : memref<16x128xf32, #tpu.memory_space<vmem>>, vector<1x128xf32>
      tpu.vector_store %arg4[%38, %c0_15], %37 {strides = array<i32>} : memref<16x128xf32, #tpu.memory_space<vmem>>, vector<1x128xf32>,
    }
    %c16_i32_2 = arith.constant 16 : i32
    %c0 = arith.constant 0 : index
    %c0_3 = arith.constant 0 : index
    %3 = vector.load %arg4[%c0, %c0_3] : memref<16x128xf32, #tpu.memory_space<vmem>>, vector<16x128xf32>
    %cst = arith.constant dense<0xFF800000> : vector<16xf32>
    %4 = vector.multi_reduction <maximumf>, %3, %cst [1] : vector<16x128xf32> to vector<16xf32>
    %5 = vector.shape_cast %4 : vector<16xf32> to vector<16x1xf32>
    %6 = vector.broadcast %5 : vector<16x1xf32> to vector<16x128xf32>
    %7 = arith.subf %3, %6 : vector<16x128xf32>
    %8 = math.exp %7 : vector<16x128xf32>
    %cst_4 = arith.constant dense<0.000000e+00> : vector<16xf32>
    %9 = vector.multi_reduction <add>, %8, %cst_4 [1] : vector<16x128xf32> to vector<16xf32>
    %10 = vector.shape_cast %9 : vector<16xf32> to vector<16x1xf32>
    %11 = math.log %10 : vector<16x1xf32>
    %12 = arith.addf %11, %5 : vector<16x1xf32>
    %c0_5 = arith.constant 0 : index
    %c0_6 = arith.constant 0 : index
    %13 = vector.load %arg3[%c0_5, %c0_6] : memref<16x1xi32, #tpu.memory_space<vmem>>, vector<16x1xi32>
    %14 = tpu.iota {dimensions = array<i32: 1>} : vector<16x128xi32>
    %15 = vector.broadcast %13 : vector<16x1xi32> to vector<16x128xi32>
    %16 = arith.cmpi eq, %14, %15 : vector<16x128xi32>
    %cst_7 = arith.constant 0.000000e+00 : f32
    %17 = vector.broadcast %cst_7 : f32 to vector<16x128xf32>
    %18 = arith.select %16, %3, %17 : vector<16x128xi1>, vector<16x128xf32>
    %cst_8 = arith.constant dense<0.000000e+00> : vector<16xf32>
    %19 = vector.multi_reduction <add>, %18, %cst_8 [1] : vector<16x128xf32> to vector<16xf32>
    %20 = vector.shape_cast %19 : vector<16xf32> to vector<16x1xf32>
    %21 = tpu.iota {dimensions = array<i32: 0>} : vector<16x1xi32>
    %22 = vector.broadcast %0 : i32 to vector<16x1xi32>
    %23 = arith.addi %22, %21 : vector<16x1xi32>
    %c16_i32_9 = arith.constant 16 : i32
    %24 = vector.broadcast %c16_i32_9 : i32 to vector<16x1xi32>
    %25 = arith.cmpi slt, %23, %24 : vector<16x1xi32>
    %26 = arith.extui %25 : vector<16x1xi1> to vector<16x1xi32>
    %27 = arith.sitofp %26 : vector<16x1xi32> to vector<16x1xf32>
    %28 = arith.subf %12, %20 : vector<16x1xf32>
    %29 = arith.mulf %28, %27 : vector<16x1xf32>
    %c0_10 = arith.constant 0 : index
    %c0_11 = arith.constant 0 : index
    %30 = vector.load %arg5[%c0_10, %c0_11] : memref<16x1xf32, #tpu.memory_space<vmem>>, vector<16x1xf32>
    tpu.vector_store %arg5[%c0_10, %c0_11], %29 {strides = array<i32>} : memref<16x1xf32, #tpu.memory_space<vmem>>, vector<16x1xf32>,
    return
  }
  func.func @transform_0(%arg0: i32, %arg1: memref<16xi32, #tpu.memory_space<smem>>) -> (i32, i32) {
    %c0_i32 = arith.constant 0 : i32
    %c0_i32_0 = arith.constant 0 : i32
    %c0_i32_1 = arith.constant 0 : i32
    return %c0_i32, %c0_i32_0 : i32, i32
  }
  func.func @transform_1(%arg0: i32, %arg1: memref<16xi32, #tpu.memory_space<smem>>) -> (i32, i32) {
    %c0_i32 = arith.constant 0 : i32
    %c0_i32_0 = arith.constant 0 : i32
    return %arg0, %c0_i32 : i32, i32
  }
  func.func @transform_2(%arg0: i32, %arg1: memref<16xi32, #tpu.memory_space<smem>>) -> (i32, i32) {
    %c0_i32 = arith.constant 0 : i32
    %c0_i32_0 = arith.constant 0 : i32
    return %arg0, %c0_i32 : i32, i32
  }
  func.func @transform_3(%arg0: i32, %arg1: memref<16xi32, #tpu.memory_space<smem>>) -> (i32, i32) {
    %c0_i32 = arith.constant 0 : i32
    %c0_i32_0 = arith.constant 0 : i32
    return %arg0, %c0_i32 : i32, i32
  }
}

</mosaic_0001>

<llo_original>
// kernel: tpu_custom_call.1
$region0: #{tpu_custom_call.1}
  #allocation0 [shape = 'u32[]', space=smem, size = 0x4, offset = 0x4, fixed_abs, tag = 'smem constant byte address 0x4 - core index']
  #allocation1 [shape = 'u32[72,128]{1,0:T(1,128)}', space=vmem, size = 0x9000, scoped, tag = 'internal scratch']
  #allocation2 [shape = 's32[1]{0}', space=sflag, size = 0x4, scoped, tag = 'scoped memory for tpu_custom_call.1']
  #allocation3 [shape = 'u8[512]{0}', space=smem, size = 0x200, scoped, tag = 'prefetched SMEM operand 0']
  %s0 = inlined_call_operand.vmem [shape: s32[16], index: 0, kind: input, shape index: {}]
  %s1 = inlined_call_operand.hbm [shape: f32[128,128], index: 1, kind: input, shape index: {}]
  %s2 = inlined_call_operand.vmem [shape: s32[16,1], index: 2, kind: input, shape index: {}]
  %s3 = inlined_call_operand.hbm [shape: f32[16,128], index: 3, kind: output, shape index: {0}]
  %s4 = inlined_call_operand.vmem [shape: f32[16,1], index: 4, kind: output, shape index: {1}]
  %5 = xla_tuple %s3, %s4
  %s6 = sld [smem:[#allocation0]]
  $region37: #{tpu_custom_call.1} parent=0
    _
  %s8 = ssub.s32 1, %s6
  %s9 = scalar_select 0, %s8, %s6
  %s11 = sshll.u32 %s0, 4
  %s12 = int_to_ptr.vmem [resolvable:$true] %s11
  %14 = dma.vmem_to_smem %s12, 16, [#allocation3], [#allocation2]
  %16 = dma.done [#allocation2], 16
  %17 = sfence
  $region1: #{tpu_custom_call.1} parent=0
    #allocation4 [shape = 'u8[65536]{0}', space=vmem, size = 0x10000, scoped, tag = 'input window, operand 1, single buffered']
    #allocation5 [shape = 's32[1]{0}', space=sflag, size = 0x4, scoped, tag = 'scoped memory for tpu_custom_call.1']
    #allocation6 [shape = 's32[1]{0}', space=sflag, size = 0x4, scoped, tag = 'scoped memory for tpu_custom_call.1']
    #allocation7 [shape = 'u8[8192]{0}', space=vmem, size = 0x2000, scoped, tag = 'output window, operand 0, single buffered']
    %18 = vsyncpa [#allocation5], 0
    %19 = vsyncpa [#allocation6], 0
    // Predicated region
    $region2: #{tpu_custom_call.1} parent=1 // pred_check
      _
    $region3: #{tpu_custom_call.1} parent=1 // pred_check_branch
      %21 = sbr.rel (0) target = $region5
    $region4: #{tpu_custom_call.1} parent=1 // pred_region
      %23 = vsyncadd [#allocation5], 0
      %s24 = sshll.u32 %s1, 4
      %s25 = int_to_ptr.hbm [resolvable:$true] %s24
      %s26 = sshll.u32 [#allocation4], 4
      %s27 = int_to_ptr.vmem [resolvable:$true] %s26
      %32 = dma.hbm_to_vmem [thread:$0]  %s25, 2048, %s27, [#allocation5], 128, 128, 8
    $region5: #{tpu_custom_call.1} parent=1 // pred_fallthru
      _
    // Predicated region
    $region6: #{tpu_custom_call.1} parent=1 // pred_check
      _
    $region7: #{tpu_custom_call.1} parent=1 // pred_check_branch
      %34 = sbr.rel (0) target = $region9
    $region8: #{tpu_custom_call.1} parent=1 // pred_region
      _
    $region9: #{tpu_custom_call.1} parent=1 // pred_fallthru
      _
    // Predicated region
    $region10: #{tpu_custom_call.1} parent=1 // pred_check
      _
    $region11: #{tpu_custom_call.1} parent=1 // pred_check_branch
      %36 = sbr.rel (0) target = $region13
    $region12: #{tpu_custom_call.1} parent=1 // pred_region
      %38 = dma.done [#allocation5], 2048
    $region13: #{tpu_custom_call.1} parent=1 // pred_fallthru
      _
    %s39 = smul.u32 0, 16
    loop: start=0, step=1, limit=16
    $region14: #{tpu_custom_call.1} parent=1 // loop_pre_header
      _
    $region15: #{tpu_custom_call.1} parent=1 // loop_header
      %s41 = sphi 0, %s45
      %p42 = scmp.ge.s32.totalorder %s41, 16
    $region16: #{tpu_custom_call.1} parent=1 // loop_header_branch
      %44 = sbr.rel (%p42) target = $region20
    $region17: #{tpu_custom_call.1} parent=1 // loop_body
      %s46 = sadd.s32 %s39, %s41
      %s47 = sld [smem:[#allocation3 + %s46]]
      %s48 = scalar_lea.vmem [#allocation4], %s47
      %v49 = vld [vmem:[%s48] sm:$0x1]
      %s50 = scalar_lea.vmem [#allocation7], %s41
      %51 = vst [vmem:[%s50] sm:$0x1] %v49
    $region18: #{tpu_custom_call.1} parent=1 // loop_footer
      %s45 = sadd.s32 1, %s41
    $region19: #{tpu_custom_call.1} parent=1 // loop_footer_branch
      %40 = sbr.rel target = $region15
    $region20: #{tpu_custom_call.1} parent=1 // loop_exit
      _
    %v52 = vld [vmem:[#allocation7] sm:$0xff]
    %v53 = vld [vmem:[#allocation7 + $0x8] sm:$0xff]
    %54 = vmax.xlane.f32.xlu0 %v52
    %v55 = vpop.xlane.xlu0 %54
    %56 = vmax.xlane.f32.xlu0 %v53
    %v57 = vpop.xlane.xlu0 %56
    %v58 = vsub.f32 %v52, %v55
    %v59 = vsub.f32 %v53, %v57
    %v60 = vmul.f32 %v58, 1.442695
    %v61 = vpow.pop %v60
    %v62 = vmul.f32 %v59, 1.442695
    %v63 = vpow.pop %v62
    %64 = vadd.xlane.f32.xlu0 %v61
    %v65 = vpop.xlane.xlu0 %64
    %66 = vadd.xlane.f32.xlu0 %v63
    %v67 = vpop.xlane.xlu0 %66
    %v68 = vlog2.pop %v65
    %v69 = vmul.f32 %v68, 0.6931472
    %v70 = vlog2.pop %v67
    %v71 = vmul.f32 %v70, 0.6931472
    %v72 = vadd.f32 %v69, %v55
    %v73 = vadd.f32 %v71, %v57
    %v74 = vld [vmem:[%s2] sm:$0xff]
    %v75 = vld [vmem:[%s2 + $0x8] sm:$0xff]
    %v76 = vlaneseq
    %v77 = vand.u32 %v76, 127
    %78 = vset.pattern.permute.xlu0 0
    %79 = vperm.xlu0 %78, %v74
    %v80 = vpop.permute.xlu0 %79
    %81 = vset.pattern.permute.xlu0 0
    %82 = vperm.xlu0 %81, %v75
    %v83 = vpop.permute.xlu0 %82
    %vm84 = vcmp.eq.s32.totalorder %v77, %v80
    %vm85 = vcmp.eq.s32.totalorder %v77, %v83
    %v86 = vsel %vm84, %v52, 0.0
    %v87 = vsel %vm85, %v53, 0.0
    %88 = vadd.xlane.f32.xlu0 %v86
    %v89 = vpop.xlane.xlu0 %88
    %90 = vadd.xlane.f32.xlu0 %v87
    %v91 = vpop.xlane.xlu0 %90
    %v92 = vlaneseq
    %v93 = vshrl.u32 %v92, 7
    %v94 = vadd.s32 %v93, 8
    %v95 = vstv %s39
    %v96 = vadd.s32 %v95, %v93
    %v97 = vadd.s32 %v95, %v94
    %vm98 = vcmp.lt.s32.totalorder %v96, 16
    %vm99 = vcmp.lt.s32.totalorder %v97, 16
    %v100 = vsel %vm98, 1, 0
    %v101 = vsel %vm99, 1, 0
    %v102 = vcvt.s32.f32 %v100
    %v103 = vcvt.s32.f32 %v101
    %v104 = vsub.f32 %v72, %v89
    %v105 = vsub.f32 %v73, %v91
    %v106 = vmul.f32 %v104, %v102
    %v107 = vmul.f32 %v105, %v103
    %vm108 = vcmask 7168
    %109 = vst.msk [vmem:[%s4] sm:$0xff] %vm108, %v106
    %110 = vst.msk [vmem:[%s4 + $0x8] sm:$0xff] %vm108, %v107
    // Predicated region
    $region21: #{tpu_custom_call.1} parent=1 // pred_check
      _
    $region22: #{tpu_custom_call.1} parent=1 // pred_check_branch
      %112 = sbr.rel (0) target = $region24
    $region23: #{tpu_custom_call.1} parent=1 // pred_region
      %114 = vsyncadd [#allocation6], 0
      %s115 = sshll.u32 [#allocation7], 4
      %s116 = int_to_ptr.vmem [resolvable:$true] %s115
      %s117 = sshll.u32 %s3, 4
      %s118 = int_to_ptr.hbm [resolvable:$true] %s117
      %123 = dma.vmem_to_hbm [thread:$0]  %s116, 256, %s118, [#allocation6], 128, 128, 8
    $region24: #{tpu_custom_call.1} parent=1 // pred_fallthru
      _
    // Predicated region
    $region25: #{tpu_custom_call.1} parent=1 // pred_check
      _
    $region26: #{tpu_custom_call.1} parent=1 // pred_check_branch
      %125 = sbr.rel (0) target = $region28
    $region27: #{tpu_custom_call.1} parent=1 // pred_region
      _
    $region28: #{tpu_custom_call.1} parent=1 // pred_fallthru
      _
    // Predicated region
    $region29: #{tpu_custom_call.1} parent=1 // pred_check
      _
    $region30: #{tpu_custom_call.1} parent=1 // pred_check_branch
      %127 = sbr.rel (0) target = $region32
    $region31: #{tpu_custom_call.1} parent=1 // pred_region
      %129 = dma.done [#allocation6], 256
    $region32: #{tpu_custom_call.1} parent=1 // pred_fallthru
      _
    // Predicated region
    $region33: #{tpu_custom_call.1} parent=1 // pred_check
      _
    $region34: #{tpu_custom_call.1} parent=1 // pred_check_branch
      %131 = sbr.rel (0) target = $region36
    $region35: #{tpu_custom_call.1} parent=1 // pred_region
      _
    $region36: #{tpu_custom_call.1} parent=1 // pred_fallthru
      _
    %132 = vsyncpa [#allocation5], 1
    %133 = vsyncpa [#allocation6], 1

</llo_original>
